<compile_context>
chip_gen: v6e
topology: v6e:2x2x1
jax: 0.10.0
libtpu: 0.0.40
codegen_flags: <defaults>
</compile_context>

<pallas_src>
import functools

import jax
import jax.numpy as jnp
from jax import lax
from jax.experimental import pallas as pl
from jax.experimental.pallas import tpu as pltpu


def _round_up(x, m):
    return (x + m - 1) // m * m


def selfattn_kernel(y_ref, a_ref, v_ref, xres_ref, gamma_ref, out_ref, *,
                    TQ, C, apply_mask):
    # y_ref:     (1, N_pad, Cpad) bf16   augmented input x~^T = [x ; 1 ; 0-pad]^T
    # a_ref:     (Cpad, Cpad)     bf16   folded Wq_aug^T @ Wk_aug
    # v_ref:     (1, C, N_pad)    bf16   hoisted value projection Wv_aug @ x~
    # xres_ref:  (1, C, TQ)       input dtype, exact residual tile
    # gamma_ref: (1,) f32, SMEM
    # out_ref:   (1, C, TQ)
    qi = pl.program_id(1)
    q_start = pl.multiple_of(qi * TQ, TQ)

    y = y_ref[0]                                    # (N_pad, Cpad) bf16, keys
    yq = y_ref[0, pl.ds(q_start, TQ), :]            # (TQ, Cpad) bf16, queries

    # qa[n, d] = sum_c yq[n, c] * A[c, d]                       -> (TQ, Cpad)
    qa = lax.dot_general(yq, a_ref[...],
                         (((1,), (0,)), ((), ())),
                         preferred_element_type=jnp.float32)

    # energy^T[m, n] = sum_d y[m, d] * qa[n, d]                 -> (N_pad, TQ)
    et = lax.dot_general(y, qa.astype(jnp.bfloat16),
                         (((1,), (1,)), ((), ())),
                         preferred_element_type=jnp.float32)

    if apply_mask:
        # "ones" channel of the augmented input: 1 for valid keys, 0 for padding.
        ones_col = y[:, C:C + 1].astype(jnp.float32)            # (N_pad, 1)
        et = et + (ones_col - 1.0) * jnp.float32(1e30)          # 0 / -1e30 bias

    # Softmax over keys (axis 0, sublane direction), kept in f32.
    m = jnp.max(et, axis=0, keepdims=True)                      # (1, TQ)
    p = jnp.exp(et - m)
    denom = jnp.sum(p, axis=0, keepdims=True)                   # (1, TQ)
    attn_t = (p * pl.reciprocal(denom, approx=True)).astype(jnp.bfloat16)

    # out[c, n] = sum_m V[c, m] * attn^T[m, n]                  -> (C, TQ)
    o = lax.dot_general(v_ref[0], attn_t,
                        (((1,), (0,)), ((), ())),
                        preferred_element_type=jnp.float32)

    gamma = gamma_ref[0]
    resid = xres_ref[0].astype(jnp.float32)                     # exact residual
    out_ref[0] = (gamma * o + resid).astype(out_ref.dtype)


def self_attn_pallas(x_nchw, wq, bq, wk, bk, wv, bv, gamma):
    B, C, W, H = x_nchw.shape
    N = W * H
    f32 = jnp.float32
    x_itemsize = jnp.dtype(x_nchw.dtype).itemsize

    Cpad = _round_up(C + 1, 16)          # channels + ones row, bf16 sublane packing

    # ---------- chip-aware tiling ----------
    try:
        vmem_cap = int(getattr(pltpu.get_tpu_info(), "vmem_capacity_bytes", 64 << 20))
    except Exception:
        vmem_cap = 64 << 20
    budget = int(0.75 * vmem_cap)

    def vmem_need(n_pad, tq):
        blocks = 2 * (n_pad * 128 * 2          # y block (lane-padded), bf16, x2 buffers
                      + Cpad * Cpad * 2        # A
                      + C * n_pad * 2          # V block
                      + 2 * C * tq * x_itemsize)   # residual + output blocks
        inter = (n_pad * tq * (4 + 4 + 4 + 2)  # energy^T, p, attn (f32) + bf16 attn
                 + tq * Cpad * 8 + C * tq * 4)
        return blocks + inter + (2 << 20)

    n_pad128 = _round_up(N, 128)
    tq = None
    for t in (1024, 512, 256, 128):          # biggest lane-aligned tile that fits
        if t > n_pad128:
            continue
        if vmem_need(_round_up(N, t), t) <= budget:
            tq = t
            break
    if tq is None:
        # TODO(synk): key-axis (flash-style online-softmax) tiling for very large N;
        # fall back to the smallest query tile until then.
        tq = 128
    N_pad = _round_up(N, tq)
    # keep both TensorCores busy (v7x megacore) when the grid would be a single program
    while B * (N_pad // tq) < 2 and tq > 128:
        tq //= 2
        N_pad = _round_up(N, tq)
    TQ = tq
    grid_q = N_pad // TQ

    # ---------- fold 1x1-conv weights; biases fold via an appended ones channel ----------
    Cq = wq.shape[0]
    wq_aug = jnp.zeros((Cq, Cpad), f32).at[:, :C].set(wq.astype(f32)).at[:, C].set(bq.astype(f32))
    wk_aug = jnp.zeros((Cq, Cpad), f32).at[:, :C].set(wk.astype(f32)).at[:, C].set(bk.astype(f32))
    wv_aug = jnp.zeros((C, Cpad), f32).at[:, :C].set(wv.astype(f32)).at[:, C].set(bv.astype(f32))
    a_mat = (wq_aug.T @ wk_aug).astype(jnp.bfloat16)                       # (Cpad, Cpad)

    x_flat = x_nchw.reshape(B, C, N)
    x_aug = jnp.concatenate([x_flat.astype(f32), jnp.ones((B, 1, N), f32)], axis=1)
    x_aug = jnp.pad(x_aug, ((0, 0), (0, Cpad - (C + 1)), (0, N_pad - N)))  # (B, Cpad, N_pad)

    # Hoisted value projection (query-tile invariant) and one-time bf16 cast of x.
    v_bf = jnp.einsum('cd,bdn->bcn', wv_aug, x_aug).astype(jnp.bfloat16)   # (B, C, N_pad)
    y_bf = jnp.transpose(x_aug, (0, 2, 1)).astype(jnp.bfloat16)            # (B, N_pad, Cpad)
    x_res = jnp.pad(x_flat, ((0, 0), (0, 0), (0, N_pad - N)))              # exact residual

    gamma_s = gamma.reshape(1).astype(f32)

    cost = pl.CostEstimate(
        flops=int(2 * B * grid_q * (TQ * Cpad * Cpad + N_pad * Cpad * TQ + C * N_pad * TQ)),
        transcendentals=int(B * grid_q * N_pad * TQ),
        bytes_accessed=int(B * grid_q * (N_pad * Cpad * 2 + Cpad * Cpad * 2
                                         + C * N_pad * 2 + 2 * C * TQ * x_itemsize)))

    need = vmem_need(N_pad, TQ)
    vmem_limit = int(min(max(need, 8 << 20), max(budget, 8 << 20)))

    kernel = functools.partial(selfattn_kernel, TQ=TQ, C=C, apply_mask=(N_pad != N))

    out_flat = pl.pallas_call(
        kernel,
        out_shape=jax.ShapeDtypeStruct((B, C, N_pad), x_nchw.dtype),
        grid_spec=pltpu.PrefetchScalarGridSpec(
            num_scalar_prefetch=0,
            grid=(B, grid_q),
            in_specs=[
                pl.BlockSpec((1, N_pad, Cpad), lambda b, q: (b, 0, 0)),    # x~^T (keys+queries)
                pl.BlockSpec((Cpad, Cpad), lambda b, q: (0, 0)),           # folded A
                pl.BlockSpec((1, C, N_pad), lambda b, q: (b, 0, 0)),       # hoisted V
                pl.BlockSpec((1, C, TQ), lambda b, q: (b, 0, q)),          # residual tile
                pl.BlockSpec(memory_space=pltpu.MemorySpace.SMEM),         # gamma scalar
            ],
            out_specs=pl.BlockSpec((1, C, TQ), lambda b, q: (b, 0, q)),
        ),
        compiler_params=pltpu.CompilerParams(
            dimension_semantics=("parallel", "parallel"),
            vmem_limit_bytes=vmem_limit),
        cost_estimate=cost,
    )(y_bf, a_mat, v_bf, x_res, gamma_s)

    return out_flat[:, :, :N].reshape(B, C, W, H)


def self_attn_ref(x_nchw, wq, bq, wk, bk, wv, bv, gamma):
    """Pure-JAX f32 reference mirroring the PyTorch forward."""
    B, C, W, H = x_nchw.shape
    N = W * H
    x_flat = x_nchw.reshape(B, C, N).astype(jnp.float32)
    q = jnp.einsum('oc,bcn->bon', wq, x_flat) + bq[None, :, None]   # (B, Cq, N)
    k = jnp.einsum('oc,bcn->bon', wk, x_flat) + bk[None, :, None]   # (B, Cq, N)
    v = jnp.einsum('oc,bcn->bon', wv, x_flat) + bv[None, :, None]   # (B, C, N)
    energy = jnp.einsum('bcn,bcm->bnm', q, k)                       # (B, N, N)
    attn = jax.nn.softmax(energy, axis=-1)
    out = jnp.einsum('bcn,bmn->bcm', v, attn)                       # (B, C, N)
    out = gamma * out + x_flat
    return out.reshape(B, C, W, H)


if __name__ == "__main__":
    B, C, W, H = 2, 16, 8, 8          # in_dim=16 -> query/key channels = 16 // 8 = 2
    Cq = C // 8

    key = jax.random.PRNGKey(0)
    ks = jax.random.split(key, 8)
    x = jax.random.normal(ks[0], (B, C, W, H), dtype=jnp.float32)
    # nn.Conv2d(in, out, 1): weight (out, in), bias (out,)
    wq = jax.random.normal(ks[1], (Cq, C), dtype=jnp.float32) * 0.1
    bq = jax.random.normal(ks[2], (Cq,), dtype=jnp.float32) * 0.1
    wk = jax.random.normal(ks[3], (Cq, C), dtype=jnp.float32) * 0.1
    bk = jax.random.normal(ks[4], (Cq,), dtype=jnp.float32) * 0.1
    wv = jax.random.normal(ks[5], (C, C), dtype=jnp.float32) * 0.1
    bv = jax.random.normal(ks[6], (C,), dtype=jnp.float32) * 0.1
    # gamma is zero-initialized in __init__; use a nonzero value to exercise the path.
    gamma = jnp.array([0.5], dtype=jnp.float32)

    out = self_attn_pallas(x, wq, bq, wk, bk, wv, bv, gamma)
    out = jax.block_until_ready(out)

    ref = self_attn_ref(x, wq, bq, wk, bk, wv, bv, gamma)
    assert out.shape == (B, C, W, H)
    # Matmul operands are bf16 (f32 accumulation), so low-order bits move vs. the
    # f32 reference; the residual and softmax stay in f32.
    assert jnp.allclose(out, ref, atol=1e-2, rtol=1e-2), "mismatch vs reference"

    print("KERNEL_OK")
</pallas_src>

<mosaic_0001>
module attributes {stable_mosaic.version = 11 : i64} {
  func.func @selfattn_kernel(%arg0: i32, %arg1: i32, %arg2: memref<1x128x32xbf16, #tpu.memory_space<vmem>>, %arg3: memref<32x32xbf16, #tpu.memory_space<vmem>>, %arg4: memref<1x16x128xbf16, #tpu.memory_space<vmem>>, %arg5: memref<1x16x128xf32, #tpu.memory_space<vmem>>, %arg6: memref<1xf32, #tpu.memory_space<smem>>, %arg7: memref<1x16x128xf32, #tpu.memory_space<vmem>>) attributes {dimension_semantics = [#tpu.dimension_semantics<parallel>, #tpu.dimension_semantics<parallel>], iteration_bounds = array<i64: 2, 1>, scalar_prefetch = 0 : i64, scratch_operands = 0 : i64, tpu.core_type = #tpu.core_type<tc>, window_params = [{transform_indices = @transform_0, window_bounds = array<i64: 1, 128, 32>}, {pipeline_mode = #tpu.pipeline_mode<synchronous>, transform_indices = @transform_1, window_bounds = array<i64: 32, 32>}, {transform_indices = @transform_2, window_bounds = array<i64: 1, 16, 128>}, {transform_indices = @transform_3, window_bounds = array<i64: 1, 16, 128>}, {transform_indices = @transform_4, window_bounds = array<i64: 1>}, {transform_indices = @transform_5, window_bounds = array<i64: 1, 16, 128>}]} {
    %c128_i32 = arith.constant 128 : i32
    %0 = arith.muli %arg1, %c128_i32 : i32
    %1 = tpu.assume_multiple %0, 128 : i32
    %c0 = arith.constant 0 : index
    %c0_0 = arith.constant 0 : index
    %c0_1 = arith.constant 0 : index
    %2 = vector.load %arg2[%c0, %c0_0, %c0_1] : memref<1x128x32xbf16, #tpu.memory_space<vmem>>, vector<1x128x32xbf16>
    %3 = vector.shape_cast %2 : vector<1x128x32xbf16> to vector<128x32xbf16>
    %c0_2 = arith.constant 0 : index
    %4 = arith.index_cast %1 : i32 to index
    %c0_3 = arith.constant 0 : index
    %5 = vector.load %arg2[%c0_2, %4, %c0_3] : memref<1x128x32xbf16, #tpu.memory_space<vmem>>, vector<1x128x32xbf16>
    %6 = vector.shape_cast %5 : vector<1x128x32xbf16> to vector<128x32xbf16>
    %c0_4 = arith.constant 0 : index
    %c0_5 = arith.constant 0 : index
    %7 = vector.load %arg3[%c0_4, %c0_5] : memref<32x32xbf16, #tpu.memory_space<vmem>>, vector<32x32xbf16>
    %cst = arith.constant dense<0.000000e+00> : vector<128x32xf32>
    %8 = tpu.matmul %6, %7, %cst {dimension_numbers = #tpu.dot_dimension_numbers<[1], [0], [0], [1], [0, 0, 1, 1], [], []>} : vector<128x32xbf16>, vector<32x32xbf16>, vector<128x32xf32> -> vector<128x32xf32>
    %9 = arith.truncf %8 : vector<128x32xf32> to vector<128x32xbf16>
    %cst_6 = arith.constant dense<0.000000e+00> : vector<128x128xf32>
    %10 = tpu.matmul %3, %9, %cst_6 {dimension_numbers = #tpu.dot_dimension_numbers<[1], [1], [0], [0], [0, 0, 1, 0], [], []>} : vector<128x32xbf16>, vector<128x32xbf16>, vector<128x128xf32> -> vector<128x128xf32>
    %11 = vector.extract_strided_slice %3 {offsets = [0, 16], sizes = [128, 1], strides = [1, 1]} : vector<128x32xbf16> to vector<128x1xbf16>
    %12 = arith.extf %11 : vector<128x1xbf16> to vector<128x1xf32>
    %cst_7 = arith.constant 1.000000e+00 : f32
    %13 = vector.broadcast %cst_7 : f32 to vector<128x1xf32>
    %14 = arith.subf %12, %13 : vector<128x1xf32>
    %cst_8 = arith.constant 1.000000e+30 : f32
    %15 = vector.broadcast %cst_8 : f32 to vector<128x1xf32>
    %16 = arith.mulf %14, %15 : vector<128x1xf32>
    %17 = vector.broadcast %16 : vector<128x1xf32> to vector<128x128xf32>
    %18 = arith.addf %10, %17 : vector<128x128xf32>
    %cst_9 = arith.constant dense<0xFF800000> : vector<128xf32>
    %19 = vector.multi_reduction <maximumf>, %18, %cst_9 [0] : vector<128x128xf32> to vector<128xf32>
    %20 = vector.shape_cast %19 : vector<128xf32> to vector<1x128xf32>
    %21 = vector.broadcast %20 : vector<1x128xf32> to vector<128x128xf32>
    %22 = arith.subf %18, %21 : vector<128x128xf32>
    %23 = math.exp %22 : vector<128x128xf32>
    %cst_10 = arith.constant dense<0.000000e+00> : vector<128xf32>
    %24 = vector.multi_reduction <add>, %23, %cst_10 [0] : vector<128x128xf32> to vector<128xf32>
    %25 = vector.shape_cast %24 : vector<128xf32> to vector<1x128xf32>
    %26 = tpu.reciprocal %25 {approx = true} : vector<1x128xf32> -> vector<1x128xf32>
    %27 = vector.broadcast %26 : vector<1x128xf32> to vector<128x128xf32>
    %28 = arith.mulf %23, %27 : vector<128x128xf32>
    %29 = arith.truncf %28 : vector<128x128xf32> to vector<128x128xbf16>
    %c0_11 = arith.constant 0 : index
    %c0_12 = arith.constant 0 : index
    %c0_13 = arith.constant 0 : index
    %30 = vector.load %arg4[%c0_11, %c0_12, %c0_13] : memref<1x16x128xbf16, #tpu.memory_space<vmem>>, vector<1x16x128xbf16>
    %31 = vector.shape_cast %30 : vector<1x16x128xbf16> to vector<16x128xbf16>
    %cst_14 = arith.constant dense<0.000000e+00> : vector<16x128xf32>
    %32 = tpu.matmul %31, %29, %cst_14 {dimension_numbers = #tpu.dot_dimension_numbers<[1], [0], [0], [1], [0, 0, 1, 1], [], []>} : vector<16x128xbf16>, vector<128x128xbf16>, vector<16x128xf32> -> vector<16x128xf32>
    %c0_15 = arith.constant 0 : index
    %33 = memref.load %arg6[%c0_15] : memref<1xf32, #tpu.memory_space<smem>>
    %c0_16 = arith.constant 0 : index
    %c0_17 = arith.constant 0 : index
    %c0_18 = arith.constant 0 : index
    %34 = vector.load %arg5[%c0_16, %c0_17, %c0_18] : memref<1x16x128xf32, #tpu.memory_space<vmem>>, vector<1x16x128xf32>
    %35 = vector.shape_cast %34 : vector<1x16x128xf32> to vector<16x128xf32>
    %36 = vector.broadcast %33 : f32 to vector<16x128xf32>
    %37 = arith.mulf %36, %32 : vector<16x128xf32>
    %38 = arith.addf %37, %35 : vector<16x128xf32>
    %c0_19 = arith.constant 0 : index
    %c0_20 = arith.constant 0 : index
    %c0_21 = arith.constant 0 : index
    %39 = vector.load %arg7[%c0_19, %c0_20, %c0_21] : memref<1x16x128xf32, #tpu.memory_space<vmem>>, vector<1x16x128xf32>
    %40 = vector.shape_cast %39 : vector<1x16x128xf32> to vector<16x128xf32>
    %41 = vector.shape_cast %38 : vector<16x128xf32> to vector<1x16x128xf32>
    tpu.vector_store %arg7[%c0_19, %c0_20, %c0_21], %41 {strides = array<i32>} : memref<1x16x128xf32, #tpu.memory_space<vmem>>, vector<1x16x128xf32>,
    return
  }
  func.func @transform_0(%arg0: i32, %arg1: i32) -> (i32, i32, i32) {
    %c0_i32 = arith.constant 0 : i32
    %c0_i32_0 = arith.constant 0 : i32
    %c0_i32_1 = arith.constant 0 : i32
    return %arg0, %c0_i32, %c0_i32_0 : i32, i32, i32
  }
  func.func @transform_1(%arg0: i32, %arg1: i32) -> (i32, i32) {
    %c0_i32 = arith.constant 0 : i32
    %c0_i32_0 = arith.constant 0 : i32
    %c0_i32_1 = arith.constant 0 : i32
    return %c0_i32, %c0_i32_0 : i32, i32
  }
  func.func @transform_2(%arg0: i32, %arg1: i32) -> (i32, i32, i32) {
    %c0_i32 = arith.constant 0 : i32
    %c0_i32_0 = arith.constant 0 : i32
    %c0_i32_1 = arith.constant 0 : i32
    return %arg0, %c0_i32, %c0_i32_0 : i32, i32, i32
  }
  func.func @transform_3(%arg0: i32, %arg1: i32) -> (i32, i32, i32) {
    %c0_i32 = arith.constant 0 : i32
    %c0_i32_0 = arith.constant 0 : i32
    return %arg0, %c0_i32, %arg1 : i32, i32, i32
  }
  func.func @transform_4(%arg0: i32, %arg1: i32) -> i32 {
    %c0_i32 = arith.constant 0 : i32
    %c0_i32_0 = arith.constant 0 : i32
    return %c0_i32 : i32
  }
  func.func @transform_5(%arg0: i32, %arg1: i32) -> (i32, i32, i32) {
    %c0_i32 = arith.constant 0 : i32
    %c0_i32_0 = arith.constant 0 : i32
    return %arg0, %c0_i32, %arg1 : i32, i32, i32
  }
}

</mosaic_0001>

<llo_original>
// kernel: tpu_custom_call.1
$region0: #{tpu_custom_call.1}
  #allocation0 [shape = 'u32[]', space=smem, size = 0x4, offset = 0x4, fixed_abs, tag = 'smem constant byte address 0x4 - core index']
  #allocation1 [shape = 'u32[144,128]{1,0:T(1,128)}', space=vmem, size = 0x12000, scoped, tag = 'internal scratch']
  #allocation2 [shape = 'f32[1]{0:T(128)S(6)}', space=smem, size = 0x200, scoped, tag = 'scoped memory for tpu_custom_call.1']
  %s0 = inlined_call_operand.vmem [shape: bf16[2,128,32], index: 0, kind: input, shape index: {}]
  %s1 = inlined_call_operand.vmem [shape: bf16[32,32], index: 1, kind: input, shape index: {}]
  %s2 = inlined_call_operand.vmem [shape: bf16[2,16,128], index: 2, kind: input, shape index: {}]
  %s3 = inlined_call_operand.vmem [shape: f32[2,16,128], index: 3, kind: input, shape index: {}]
  %s4 = inlined_call_operand.<no memory space> [shape: f32[1], index: 4, kind: input, shape index: {}]
  %s5 = inlined_call_operand.hbm [shape: f32[2,16,128], index: 5, kind: output, shape index: {}]
  %s6 = sld [smem:[#allocation0]]
  $region53: #{tpu_custom_call.1} parent=0
    _
  %s8 = ssub.s32 1, %s6
  %s9 = scalar_select 0, %s8, %s6
  %10 = sst [smem:[#allocation2]] %s4
  $region1: #{tpu_custom_call.1} parent=0
    #allocation3 [shape = 'u8[16384]{0}', space=vmem, size = 0x4000, scoped, tag = 'output window, operand 0']
    #allocation4 [shape = 's32[2]{0}', space=sflag, size = 0x8, scoped, tag = 'scoped memory for tpu_custom_call.1']
    %11 = vsyncpa [#allocation4], 0
    %s12 = scalar_lea.sflag [#allocation4], 1
    %13 = vsyncpa %s12, 0
    loop: start=0, step=1, limit=4
    $region2: #{tpu_custom_call.1} parent=1 // loop_pre_header
      _
    $region3: #{tpu_custom_call.1} parent=1 // loop_header
      %s15 = sphi 0, %s19
      %p16 = scmp.ge.s32.totalorder %s15, 4
      %s22 = sphi 0, %s34
      %s23 = sphi 0, %s30
      %s24 = sphi 0, %s22
      %s25 = sphi 0, %s23
      %s26 = sphi 0, %s24
      %s27 = sphi 0, %s25
      %s37 = sphi 0, %s39
      %s40 = sphi 0, %s37
      %s41 = sphi 0, %s40
      %s57 = sphi 0, %s41
      %s61 = sphi 0, %s61
      %s63 = sphi 0, %s61
      %s64 = sphi 0, %s63
      %s78 = sphi 0, %s64
      %s84 = sphi 0, %s86
      %s87 = sphi 0, %s84
      %s88 = sphi 0, %s87
      %s104 = sphi 0, %s88
      %s112 = sphi 0, %s114
      %s115 = sphi 0, %s112
      %s116 = sphi 0, %s115
      %s132 = sphi 0, %s116
      %s136 = sphi 0, %s136
      %s138 = sphi 0, %s136
      %s139 = sphi 0, %s138
      %s153 = sphi 0, %s139
      %s161 = sphi 0, %s163
      %s164 = sphi 0, %s161
      %s165 = sphi 0, %s164
      %s181 = sphi 0, %s165
    $region4: #{tpu_custom_call.1} parent=1 // loop_header_branch
      %18 = sbr.rel (%p16) target = $region8
    $region5: #{tpu_custom_call.1} parent=1 // loop_body
      %s20 = ssub.s32 %s15, 1
      %s21 = ssub.s32 %s15, 2
      %s28 = sadd.s32 1, %s23
      %p29 = scmp.ge.s32.totalorder %s28, 1
      %s30 = scalar_select %p29, 0, %s28
      %s31 = sadd.s32 1, %s22
      %s32 = scalar_select %p29, %s31, %s22
      %p33 = scmp.ge.s32.totalorder %s32, 2
      %s34 = scalar_select %p33, 0, %s32
      %s35 = ssub.s32 %s22, %s34
      %p36 = scmp.eq.s32.totalorder %s35, 0
      %s38 = sadd.s32 %s37, 1
      %s39 = scalar_select %p36, %s37, %s38
      %p42 = pneg %p36
      %p43 = scmp.eq.s32.totalorder %s15, 1
      %p44 = por %p42, %p43
      %p45 = scmp.ne.s32.totalorder %s37, %s40
      %p46 = scmp.eq.s32.totalorder %s15, 0
      %p47 = por %p45, %p46
      %p48 = scmp.ne.s32.totalorder %s37, %s40
      %p49 = scmp.eq.s32.totalorder %s20, 1
      %p50 = por %p48, %p49
      %p51 = scmp.ne.s32.totalorder %s40, %s41
      %p52 = scmp.eq.s32.totalorder %s20, 0
      %p53 = por %p51, %p52
      %p54 = scmp.ne.s32.totalorder %s40, %s41
      %p55 = scmp.eq.s32.totalorder %s21, 1
      %p56 = por %p54, %p55
      %p58 = scmp.ne.s32.totalorder %s41, %s57
      %p59 = scmp.eq.s32.totalorder %s21, 0
      %p60 = por %p58, %p59
      %s62 = sadd.s32 %s61, 1
      %p65 = scmp.eq.s32.totalorder %s15, 1
      %p66 = scmp.ne.s32.totalorder %s61, %s63
      %p67 = scmp.eq.s32.totalorder %s15, 0
      %p68 = por %p66, %p67
      %p69 = scmp.ne.s32.totalorder %s61, %s63
      %p70 = scmp.eq.s32.totalorder %s20, 1
      %p71 = por %p69, %p70
      %p72 = scmp.ne.s32.totalorder %s63, %s64
      %p73 = scmp.eq.s32.totalorder %s20, 0
      %p74 = por %p72, %p73
      %p75 = scmp.ne.s32.totalorder %s63, %s64
      %p76 = scmp.eq.s32.totalorder %s21, 1
      %p77 = por %p75, %p76
      %p79 = scmp.ne.s32.totalorder %s64, %s78
      %p80 = scmp.eq.s32.totalorder %s21, 0
      %p81 = por %p79, %p80
      %s82 = ssub.s32 %s22, %s34
      %p83 = scmp.eq.s32.totalorder %s82, 0
      %s85 = sadd.s32 %s84, 1
      %s86 = scalar_select %p83, %s84, %s85
      %p89 = pneg %p83
      %p90 = scmp.eq.s32.totalorder %s15, 1
      %p91 = por %p89, %p90
      %p92 = scmp.ne.s32.totalorder %s84, %s87
      %p93 = scmp.eq.s32.totalorder %s15, 0
      %p94 = por %p92, %p93
      %p95 = scmp.ne.s32.totalorder %s84, %s87
      %p96 = scmp.eq.s32.totalorder %s20, 1
      %p97 = por %p95, %p96
      %p98 = scmp.ne.s32.totalorder %s87, %s88
      %p99 = scmp.eq.s32.totalorder %s20, 0
      %p100 = por %p98, %p99
      %p101 = scmp.ne.s32.totalorder %s87, %s88
      %p102 = scmp.eq.s32.totalorder %s21, 1
      %p103 = por %p101, %p102
      %p105 = scmp.ne.s32.totalorder %s88, %s104
      %p106 = scmp.eq.s32.totalorder %s21, 0
      %p107 = por %p105, %p106
      %s108 = ssub.s32 %s22, %s34
      %s109 = ssub.s32 %s23, %s30
      %s110 = sor.u32 %s108, %s109
      %p111 = scmp.eq.s32.totalorder %s110, 0
      %s113 = sadd.s32 %s112, 1
      %s114 = scalar_select %p111, %s112, %s113
      %p117 = pneg %p111
      %p118 = scmp.eq.s32.totalorder %s15, 1
      %p119 = por %p117, %p118
      %p120 = scmp.ne.s32.totalorder %s112, %s115
      %p121 = scmp.eq.s32.totalorder %s15, 0
      %p122 = por %p120, %p121
      %p123 = scmp.ne.s32.totalorder %s112, %s115
      %p124 = scmp.eq.s32.totalorder %s20, 1
      %p125 = por %p123, %p124
      %p126 = scmp.ne.s32.totalorder %s115, %s116
      %p127 = scmp.eq.s32.totalorder %s20, 0
      %p128 = por %p126, %p127
      %p129 = scmp.ne.s32.totalorder %s115, %s116
      %p130 = scmp.eq.s32.totalorder %s21, 1
      %p131 = por %p129, %p130
      %p133 = scmp.ne.s32.totalorder %s116, %s132
      %p134 = scmp.eq.s32.totalorder %s21, 0
      %p135 = por %p133, %p134
      %s137 = sadd.s32 %s136, 1
      %p140 = scmp.eq.s32.totalorder %s15, 1
      %p141 = scmp.ne.s32.totalorder %s136, %s138
      %p142 = scmp.eq.s32.totalorder %s15, 0
      %p143 = por %p141, %p142
      %p144 = scmp.ne.s32.totalorder %s136, %s138
      %p145 = scmp.eq.s32.totalorder %s20, 1
      %p146 = por %p144, %p145
      %p147 = scmp.ne.s32.totalorder %s138, %s139
      %p148 = scmp.eq.s32.totalorder %s20, 0
      %p149 = por %p147, %p148
      %p150 = scmp.ne.s32.totalorder %s138, %s139
      %p151 = scmp.eq.s32.totalorder %s21, 1
      %p152 = por %p150, %p151
      %p154 = scmp.ne.s32.totalorder %s139, %s153
      %p155 = scmp.eq.s32.totalorder %s21, 0
      %p156 = por %p154, %p155
      %s157 = ssub.s32 %s22, %s34
      %s158 = ssub.s32 %s23, %s30
      %s159 = sor.u32 %s157, %s158
      %p160 = scmp.eq.s32.totalorder %s159, 0
      %s162 = sadd.s32 %s161, 1
      %s163 = scalar_select %p160, %s161, %s162
      %p166 = pneg %p160
      %p167 = scmp.eq.s32.totalorder %s15, 1
      %p168 = por %p166, %p167
      %p169 = scmp.ne.s32.totalorder %s161, %s164
      %p170 = scmp.eq.s32.totalorder %s15, 0
      %p171 = por %p169, %p170
      %p172 = scmp.ne.s32.totalorder %s161, %s164
      %p173 = scmp.eq.s32.totalorder %s20, 1
      %p174 = por %p172, %p173
      %p175 = scmp.ne.s32.totalorder %s164, %s165
      %p176 = scmp.eq.s32.totalorder %s20, 0
      %p177 = por %p175, %p176
      %p178 = scmp.ne.s32.totalorder %s164, %s165
      %p179 = scmp.eq.s32.totalorder %s21, 1
      %p180 = por %p178, %p179
      %p182 = scmp.ne.s32.totalorder %s165, %s181
      %p183 = scmp.eq.s32.totalorder %s21, 0
      %p184 = por %p182, %p183
      %p185 = scmp.le.s32.totalorder 1, %s15
      %p186 = scmp.lt.s32.totalorder %s15, 3
      %p187 = pnand %p185, %p186
      %p188 = pneg %p187
      // Predicated region
      $region9: #{tpu_custom_call.1} parent=5 // pred_check
        _
      $region10: #{tpu_custom_call.1} parent=5 // pred_check_branch
        %190 = sbr.rel (%p187) target = $region12
      $region11: #{tpu_custom_call.1} parent=5 // pred_region
        %s191 = ssub.s32 %s15, 1
        // Predicated region
        $region13: #{tpu_custom_call.1} parent=11 // pred_check
          %p192 = pneg %p74
        $region14: #{tpu_custom_call.1} parent=11 // pred_check_branch
          %194 = sbr.rel (%p192) target = $region16
        $region15: #{tpu_custom_call.1} parent=11 // pred_region
          _
        $region16: #{tpu_custom_call.1} parent=11 // pred_fallthru
          _
        // Predicated region
        $region17: #{tpu_custom_call.1} parent=11 // pred_check
          %p195 = pneg %p149
        $region18: #{tpu_custom_call.1} parent=11 // pred_check_branch
          %197 = sbr.rel (%p195) target = $region20
        $region19: #{tpu_custom_call.1} parent=11 // pred_region
          _
        $region20: #{tpu_custom_call.1} parent=11 // pred_fallthru
          _
      $region12: #{tpu_custom_call.1} parent=5 // pred_fallthru
        _
      %p198 = scmp.lt.s32.totalorder %s15, 2
      // Predicated region
      $region21: #{tpu_custom_call.1} parent=5 // pred_check
        %p199 = pneg %p198
      $region22: #{tpu_custom_call.1} parent=5 // pred_check_branch
        %201 = sbr.rel (%p199) target = $region24
      $region23: #{tpu_custom_call.1} parent=5 // pred_region
        // Predicated region
        $region25: #{tpu_custom_call.1} parent=23 // pred_check
          %p202 = pneg %p47
        $region26: #{tpu_custom_call.1} parent=23 // pred_check_branch
          %204 = sbr.rel (%p202) target = $region28
        $region27: #{tpu_custom_call.1} parent=23 // pred_region
          %p205 = scmp.lt.s32.totalorder %s22, 1
          %s206 = scalar_select %p205, %s22, 1
          %s207 = smul.addr %s206, 16
          %s208 = smul.addr %s207, 4
          %s209 = scalar_lea.vmem %s0, %s208
        $region28: #{tpu_custom_call.1} parent=23 // pred_fallthru
          _
        // Predicated region
        $region29: #{tpu_custom_call.1} parent=23 // pred_check
          %p210 = pneg %p94
        $region30: #{tpu_custom_call.1} parent=23 // pred_check_branch
          %212 = sbr.rel (%p210) target = $region32
        $region31: #{tpu_custom_call.1} parent=23 // pred_region
          %p213 = scmp.lt.s32.totalorder %s22, 1
          %s214 = scalar_select %p213, %s22, 1
          %s215 = smul.addr %s214, 2
          %s216 = smul.addr %s215, 4
          %s217 = scalar_lea.vmem %s2, %s216
        $region32: #{tpu_custom_call.1} parent=23 // pred_fallthru
          _
        // Predicated region
        $region33: #{tpu_custom_call.1} parent=23 // pred_check
          %p218 = pneg %p122
        $region34: #{tpu_custom_call.1} parent=23 // pred_check_branch
          %220 = sbr.rel (%p218) target = $region36
        $region35: #{tpu_custom_call.1} parent=23 // pred_region
          %p221 = scmp.lt.s32.totalorder %s22, 1
          %s222 = scalar_select %p221, %s22, 1
          %p223 = scmp.lt.s32.totalorder %s23, 0
          %s224 = scalar_select %p223, %s23, 0
          %s225 = smul.addr %s222, 2
          %s226 = sadd.s32 %s224, %s225
          %s227 = smul.addr %s226, 8
          %s228 = scalar_lea.vmem %s3, %s227
        $region36: #{tpu_custom_call.1} parent=23 // pred_fallthru
          _
      $region24: #{tpu_custom_call.1} parent=5 // pred_fallthru
        _
      %p229 = scmp.le.s32.totalorder 1, %s15
      %p230 = scmp.lt.s32.totalorder %s15, 3
      %p231 = pnand %p229, %p230
      %p232 = pneg %p231
      // Predicated region
      $region37: #{tpu_custom_call.1} parent=5 // pred_check
        _
      $region38: #{tpu_custom_call.1} parent=5 // pred_check_branch
        %234 = sbr.rel (%p231) target = $region40
      $region39: #{tpu_custom_call.1} parent=5 // pred_region
        %s235 = ssub.s32 %s15, 1
        %p236 = scmp.lt.s32.totalorder %s24, 1
        %s237 = scalar_select %p236, %s24, 1
        %s238 = smul.addr %s237, 16
        %s239 = smul.addr %s238, 4
        %s240 = scalar_lea.vmem %s0, %s239
        %p241 = pneg %p53
        %p242 = pneg %p50
        %p243 = pneg %p74
        %p244 = pneg %p71
        %p245 = scmp.lt.s32.totalorder %s24, 1
        %s246 = scalar_select %p245, %s24, 1
        %s247 = smul.addr %s246, 2
        %s248 = smul.addr %s247, 4
        %s249 = scalar_lea.vmem %s2, %s248
        %p250 = pneg %p100
        %p251 = pneg %p97
        %p252 = scmp.lt.s32.totalorder %s24, 1
        %s253 = scalar_select %p252, %s24, 1
        %p254 = scmp.lt.s32.totalorder %s25, 0
        %s255 = scalar_select %p254, %s25, 0
        %s256 = smul.addr %s253, 2
        %s257 = sadd.s32 %s255, %s256
        %s258 = smul.addr %s257, 8
        %s259 = scalar_lea.vmem %s3, %s258
        %p260 = pneg %p128
        %p261 = pneg %p125
        %p262 = pneg %p149
        %p263 = pneg %p146
        %p264 = pneg %p177
        %p265 = pneg %p174
        %s266 = sand.u32 %s164, 1
        %s267 = scalar_lea.sflag [#allocation4], %s266
        %s268 = sand.u32 %s164, 1
        %s269 = smul.addr %s268, 16
        %s270 = scalar_lea.vmem [#allocation3], %s269
        %p271 = scmp.lt.s32.totalorder %s24, 1
        %s272 = scalar_select %p271, %s24, 1
        %s273 = smul.addr %s272, 16
        %s274 = smul.addr %s273, 4
        %s275 = scalar_lea.vmem %s0, %s274
        %p276 = scmp.lt.s32.totalorder %s24, 1
        %s277 = scalar_select %p276, %s24, 1
        %s278 = smul.addr %s277, 2
        %s279 = smul.addr %s278, 4
        %s280 = scalar_lea.vmem %s2, %s279
        %p281 = scmp.lt.s32.totalorder %s24, 1
        %s282 = scalar_select %p281, %s24, 1
        %p283 = scmp.lt.s32.totalorder %s25, 0
        %s284 = scalar_select %p283, %s25, 0
        %s285 = smul.addr %s282, 2
        %s286 = sadd.s32 %s284, %s285
        %s287 = smul.addr %s286, 8
        %s288 = scalar_lea.vmem %s3, %s287
        %s290 = smul.u32 %s25, 128
        %v291 = vld [vmem:[%s275] sm:$0xf]
        %v292 = vld [vmem:[%s275 + $0x4] sm:$0xf]
        %v293 = vld [vmem:[%s275 + $0x8] sm:$0xf]
        %v294 = vld [vmem:[%s275 + $0xc] sm:$0xf]
        %v295 = vld [vmem:[%s275 + $0x10] sm:$0xf]
        %v296 = vld [vmem:[%s275 + $0x14] sm:$0xf]
        %v297 = vld [vmem:[%s275 + $0x18] sm:$0xf]
        %v298 = vld [vmem:[%s275 + $0x1c] sm:$0xf]
        %v299 = vld [vmem:[%s275 + $0x20] sm:$0xf]
        %v300 = vld [vmem:[%s275 + $0x24] sm:$0xf]
        %v301 = vld [vmem:[%s275 + $0x28] sm:$0xf]
        %v302 = vld [vmem:[%s275 + $0x2c] sm:$0xf]
        %v303 = vld [vmem:[%s275 + $0x30] sm:$0xf]
        %v304 = vld [vmem:[%s275 + $0x34] sm:$0xf]
        %v305 = vld [vmem:[%s275 + $0x38] sm:$0xf]
        %v306 = vld [vmem:[%s275 + $0x3c] sm:$0xf]
        %s307 = sshra.s32 %s290, 3
        %s308 = sand.u32 %s290, 7
        %s309 = smul.addr %s307, 4
        %s310 = scalar_lea.vmem %s275, %s309
        %v311 = vld [vmem:[%s310] sm:$0xf]
        %v312 = vld [vmem:[%s310 + $0x4] sm:$0xf]
        %v313 = vld [vmem:[%s310 + $0x8] sm:$0xf]
        %v314 = vld [vmem:[%s310 + $0xc] sm:$0xf]
        %v315 = vld [vmem:[%s310 + $0x10] sm:$0xf]
        %v316 = vld [vmem:[%s310 + $0x14] sm:$0xf]
        %v317 = vld [vmem:[%s310 + $0x18] sm:$0xf]
        %v318 = vld [vmem:[%s310 + $0x1c] sm:$0xf]
        %v319 = vld [vmem:[%s310 + $0x20] sm:$0xf]
        %v320 = vld [vmem:[%s310 + $0x24] sm:$0xf]
        %v321 = vld [vmem:[%s310 + $0x28] sm:$0xf]
        %v322 = vld [vmem:[%s310 + $0x2c] sm:$0xf]
        %v323 = vld [vmem:[%s310 + $0x30] sm:$0xf]
        %v324 = vld [vmem:[%s310 + $0x34] sm:$0xf]
        %v325 = vld [vmem:[%s310 + $0x38] sm:$0xf]
        %v326 = vld [vmem:[%s310 + $0x3c] sm:$0xf]
        %v327 = vld [vmem:[%s1] sm:$0xf]
        %v328 = vld [vmem:[%s1 + $0x4] sm:$0xf]
        %v329 = vld [vmem:[%s1 + $0x8] sm:$0xf]
        %v330 = vld [vmem:[%s1 + $0xc] sm:$0xf]
        %v347 = vunpack.c.l.b16 %v311
        %v348 = vunpack.c.l.b16 %v312
        %v349 = vunpack.c.l.b16 %v313
        %v350 = vunpack.c.l.b16 %v314
        %v351 = vunpack.c.l.b16 %v315
        %v352 = vunpack.c.l.b16 %v316
        %v353 = vunpack.c.l.b16 %v317
        %v354 = vunpack.c.l.b16 %v318
        %v355 = vunpack.c.l.b16 %v319
        %v356 = vunpack.c.l.b16 %v320
        %v357 = vunpack.c.l.b16 %v321
        %v358 = vunpack.c.l.b16 %v322
        %v359 = vunpack.c.l.b16 %v323
        %v360 = vunpack.c.l.b16 %v324
        %v361 = vunpack.c.l.b16 %v325
        %v362 = vunpack.c.l.b16 %v326
        %v363 = vpack.c.b16 %v348, %v347
        %v364 = vpack.c.b16 %v350, %v349
        %v365 = vpack.c.b16 %v352, %v351
        %v366 = vpack.c.b16 %v354, %v353
        %v367 = vpack.c.b16 %v356, %v355
        %v368 = vpack.c.b16 %v358, %v357
        %v369 = vpack.c.b16 %v360, %v359
        %v370 = vpack.c.b16 %v362, %v361
        %v375 = vunpack.c.l.b16 %v327
        %v376 = vunpack.c.l.b16 %v328
        %v377 = vunpack.c.l.b16 %v329
        %v378 = vunpack.c.l.b16 %v330
        %v379 = vpack.c.b16 %v376, %v375
        %v380 = vpack.c.b16 %v378, %v377
        %vm383 = vcmask 261120
        %v385 = vsel %vm383, %v363, 0
        %v388 = vsel %vm383, %v364, 0
        %v391 = vsel %vm383, %v365, 0
        %v394 = vsel %vm383, %v366, 0
        %v397 = vsel %vm383, %v367, 0
        %v400 = vsel %vm383, %v368, 0
        %v403 = vsel %vm383, %v369, 0
        %v406 = vsel %vm383, %v370, 0
        %408 = vmatprep.subr.bf16.mxu0 0
        %409 = vmatpush1.bf16.msra.mxu0 0
        %410 = vmatprep.subr.bf16.mxu0 0
        %411 = vmatpush1.bf16.msra.mxu0 0
        %412 = vmatprep.subr.bf16.mxu0 0
        %413 = vmatpush1.bf16.msra.mxu0 0
        %414 = vmatprep.subr.bf16.mxu0 0
        %415 = vmatpush1.bf16.msra.mxu0 0
        %416 = vmatprep.subr.bf16.mxu0 0
        %417 = vmatpush1.bf16.msra.mxu0 0
        %418 = vmatprep.subr.bf16.mxu0 0
        %419 = vmatpush1.bf16.msra.mxu0 0
        %420 = vmatprep.subr.bf16.mxu0 0
        %421 = vmatpush1.bf16.msra.mxu0 %v380
        %422 = vmatprep.subr.bf16.mxu0 0
        %423 = vmatpush1.bf16.msra.mxu0 %v379
        %424 = vmatprep.subr.bf16.mxu0 0
        %425 = vmatpush2.bf16.msra.mxu0 0
        %426 = vmatprep.subr.bf16.mxu0 0
        %427 = vmatpush2.bf16.msra.mxu0 0
        %428 = vmatprep.subr.bf16.mxu0 0
        %429 = vmatpush2.bf16.msra.mxu0 0
        %430 = vmatprep.subr.bf16.mxu0 0
        %431 = vmatpush2.bf16.msra.mxu0 0
        %432 = vmatprep.subr.bf16.mxu0 0
        %433 = vmatpush2.bf16.msra.mxu0 0
        %434 = vmatprep.subr.bf16.mxu0 0
        %435 = vmatpush2.bf16.msra.mxu0 0
        %436 = vmatprep.subr.bf16.mxu0 0
        %437 = vmatpush2.bf16.msra.mxu0 0
        %438 = vmatprep.subr.bf16.mxu0 0
        %439 = vmatpush2.bf16.msra.mxu0 0
        %440 = vmatprep.mubr.bf16.mxu0 0
        %441 = vmatmul.mubr.bf16.gmra.mxu0 %v385
        %v442 = vpop.f32.mrf.mxu0
        %v443 = vadd.f32 0.0, %v442
        %v444 = vpop.f32.mrf.mxu0
        %v445 = vpop.f32.mrf.mxu0
        %v446 = vadd.f32 0.0, %v445
        %v447 = vpop.f32.mrf.mxu0
        %448 = vmatprep.mubr.bf16.mxu0 0
        %449 = vmatmul.mubr.bf16.gmra.mxu0 %v388
        %v450 = vpop.f32.mrf.mxu0
        %v451 = vadd.f32 0.0, %v450
        %v452 = vpop.f32.mrf.mxu0
        %v453 = vpop.f32.mrf.mxu0
        %v454 = vadd.f32 0.0, %v453
        %v455 = vpop.f32.mrf.mxu0
        %456 = vmatprep.mubr.bf16.mxu0 0
        %457 = vmatmul.mubr.bf16.gmra.mxu0 %v391
        %v458 = vpop.f32.mrf.mxu0
        %v459 = vadd.f32 0.0, %v458
        %v460 = vpop.f32.mrf.mxu0
        %v461 = vpop.f32.mrf.mxu0
        %v462 = vadd.f32 0.0, %v461
        %v463 = vpop.f32.mrf.mxu0
        %464 = vmatprep.mubr.bf16.mxu0 0
        %465 = vmatmul.mubr.bf16.gmra.mxu0 %v394
        %v466 = vpop.f32.mrf.mxu0
        %v467 = vadd.f32 0.0, %v466
        %v468 = vpop.f32.mrf.mxu0
        %v469 = vpop.f32.mrf.mxu0
        %v470 = vadd.f32 0.0, %v469
        %v471 = vpop.f32.mrf.mxu0
        %472 = vmatprep.mubr.bf16.mxu0 0
        %473 = vmatmul.mubr.bf16.gmra.mxu0 %v397
        %v474 = vpop.f32.mrf.mxu0
        %v475 = vadd.f32 0.0, %v474
        %v476 = vpop.f32.mrf.mxu0
        %v477 = vpop.f32.mrf.mxu0
        %v478 = vadd.f32 0.0, %v477
        %v479 = vpop.f32.mrf.mxu0
        %480 = vmatprep.mubr.bf16.mxu0 0
        %481 = vmatmul.mubr.bf16.gmra.mxu0 %v400
        %v482 = vpop.f32.mrf.mxu0
        %v483 = vadd.f32 0.0, %v482
        %v484 = vpop.f32.mrf.mxu0
        %v485 = vpop.f32.mrf.mxu0
        %v486 = vadd.f32 0.0, %v485
        %v487 = vpop.f32.mrf.mxu0
        %488 = vmatprep.mubr.bf16.mxu0 0
        %489 = vmatmul.mubr.bf16.gmra.mxu0 %v403
        %v490 = vpop.f32.mrf.mxu0
        %v491 = vadd.f32 0.0, %v490
        %v492 = vpop.f32.mrf.mxu0
        %v493 = vpop.f32.mrf.mxu0
        %v494 = vadd.f32 0.0, %v493
        %v495 = vpop.f32.mrf.mxu0
        %496 = vmatprep.mubr.bf16.mxu0 0
        %497 = vmatmul.mubr.bf16.gmra.mxu0 %v406
        %v498 = vpop.f32.mrf.mxu0
        %v499 = vadd.f32 0.0, %v498
        %v500 = vpop.f32.mrf.mxu0
        %v501 = vpop.f32.mrf.mxu0
        %v502 = vadd.f32 0.0, %v501
        %v503 = vpop.f32.mrf.mxu0
        %504 = vdwg.mxu0
        %v505 = vpack.c.bf16 %v446, %v443
        %v506 = vpack.c.bf16 %v454, %v451
        %v507 = vpack.c.bf16 %v462, %v459
        %v508 = vpack.c.bf16 %v470, %v467
        %v509 = vpack.c.bf16 %v478, %v475
        %v510 = vpack.c.bf16 %v486, %v483
        %v511 = vpack.c.bf16 %v494, %v491
        %v512 = vpack.c.bf16 %v502, %v499
        %v513 = vunpack.c.l.bf16 %v291
        %v514 = vunpack.c.l.bf16 %v292
        %v515 = vunpack.c.l.bf16 %v293
        %v516 = vunpack.c.l.bf16 %v294
        %v517 = vunpack.c.l.bf16 %v295
        %v518 = vunpack.c.l.bf16 %v296
        %v519 = vunpack.c.l.bf16 %v297
        %v520 = vunpack.c.l.bf16 %v298
        %v521 = vunpack.c.l.bf16 %v299
        %v522 = vunpack.c.l.bf16 %v300
        %v523 = vunpack.c.l.bf16 %v301
        %v524 = vunpack.c.l.bf16 %v302
        %v525 = vunpack.c.l.bf16 %v303
        %v526 = vunpack.c.l.bf16 %v304
        %v527 = vunpack.c.l.bf16 %v305
        %v528 = vunpack.c.l.bf16 %v306
        %v529 = vsub.f32 %v513, 1.0
        %v530 = vsub.f32 %v514, 1.0
        %v531 = vsub.f32 %v515, 1.0
        %v532 = vsub.f32 %v516, 1.0
        %v533 = vsub.f32 %v517, 1.0
        %v534 = vsub.f32 %v518, 1.0
        %v535 = vsub.f32 %v519, 1.0
        %v536 = vsub.f32 %v520, 1.0
        %v537 = vsub.f32 %v521, 1.0
        %v538 = vsub.f32 %v522, 1.0
        %v539 = vsub.f32 %v523, 1.0
        %v540 = vsub.f32 %v524, 1.0
        %v541 = vsub.f32 %v525, 1.0
        %v542 = vsub.f32 %v526, 1.0
        %v543 = vsub.f32 %v527, 1.0
        %v544 = vsub.f32 %v528, 1.0
        %v545 = vmul.f32 %v529, 1e+30
        %v546 = vmul.f32 %v530, 1e+30
        %v547 = vmul.f32 %v531, 1e+30
        %v548 = vmul.f32 %v532, 1e+30
        %v549 = vmul.f32 %v533, 1e+30
        %v550 = vmul.f32 %v534, 1e+30
        %v551 = vmul.f32 %v535, 1e+30
        %v552 = vmul.f32 %v536, 1e+30
        %v553 = vmul.f32 %v537, 1e+30
        %v554 = vmul.f32 %v538, 1e+30
        %v555 = vmul.f32 %v539, 1e+30
        %v556 = vmul.f32 %v540, 1e+30
        %v557 = vmul.f32 %v541, 1e+30
        %v558 = vmul.f32 %v542, 1e+30
        %v559 = vmul.f32 %v543, 1e+30
        %v560 = vmul.f32 %v544, 1e+30
        %562 = vset.pattern.permute.xlu0 16
        %563 = vperm.xlu0 %562, %v545
        %v564 = vpop.permute.xlu0 %563
        %567 = vset.pattern.permute.xlu0 16
        %568 = vperm.xlu0 %567, %v546
        %v569 = vpop.permute.xlu0 %568
        %572 = vset.pattern.permute.xlu0 16
        %573 = vperm.xlu0 %572, %v547
        %v574 = vpop.permute.xlu0 %573
        %577 = vset.pattern.permute.xlu0 16
        %578 = vperm.xlu0 %577, %v548
        %v579 = vpop.permute.xlu0 %578
        %582 = vset.pattern.permute.xlu0 16
        %583 = vperm.xlu0 %582, %v549
        %v584 = vpop.permute.xlu0 %583
        %587 = vset.pattern.permute.xlu0 16
        %588 = vperm.xlu0 %587, %v550
        %v589 = vpop.permute.xlu0 %588
        %592 = vset.pattern.permute.xlu0 16
        %593 = vperm.xlu0 %592, %v551
        %v594 = vpop.permute.xlu0 %593
        %597 = vset.pattern.permute.xlu0 16
        %598 = vperm.xlu0 %597, %v552
        %v599 = vpop.permute.xlu0 %598
        %602 = vset.pattern.permute.xlu0 16
        %603 = vperm.xlu0 %602, %v553
        %v604 = vpop.permute.xlu0 %603
        %607 = vset.pattern.permute.xlu0 16
        %608 = vperm.xlu0 %607, %v554
        %v609 = vpop.permute.xlu0 %608
        %612 = vset.pattern.permute.xlu0 16
        %613 = vperm.xlu0 %612, %v555
        %v614 = vpop.permute.xlu0 %613
        %617 = vset.pattern.permute.xlu0 16
        %618 = vperm.xlu0 %617, %v556
        %v619 = vpop.permute.xlu0 %618
        %622 = vset.pattern.permute.xlu0 16
        %623 = vperm.xlu0 %622, %v557
        %v624 = vpop.permute.xlu0 %623
        %627 = vset.pattern.permute.xlu0 16
        %628 = vperm.xlu0 %627, %v558
        %v629 = vpop.permute.xlu0 %628
        %632 = vset.pattern.permute.xlu0 16
        %633 = vperm.xlu0 %632, %v559
        %v634 = vpop.permute.xlu0 %633
        %637 = vset.pattern.permute.xlu0 16
        %638 = vperm.xlu0 %637, %v560
        %v639 = vpop.permute.xlu0 %638
        %v657 = vunpack.c.l.b16 %v291
        %v658 = vunpack.c.l.b16 %v292
        %v659 = vunpack.c.l.b16 %v293
        %v660 = vunpack.c.l.b16 %v294
        %v661 = vunpack.c.l.b16 %v295
        %v662 = vunpack.c.l.b16 %v296
        %v663 = vunpack.c.l.b16 %v297
        %v664 = vunpack.c.l.b16 %v298
        %v665 = vunpack.c.l.b16 %v299
        %v666 = vunpack.c.l.b16 %v300
        %v667 = vunpack.c.l.b16 %v301
        %v668 = vunpack.c.l.b16 %v302
        %v669 = vunpack.c.l.b16 %v303
        %v670 = vunpack.c.l.b16 %v304
        %v671 = vunpack.c.l.b16 %v305
        %v672 = vunpack.c.l.b16 %v306
        %v673 = vpack.c.b16 %v658, %v657
        %v674 = vpack.c.b16 %v660, %v659
        %v675 = vpack.c.b16 %v662, %v661
        %v676 = vpack.c.b16 %v664, %v663
        %v677 = vpack.c.b16 %v666, %v665
        %v678 = vpack.c.b16 %v668, %v667
        %v679 = vpack.c.b16 %v670, %v669
        %v680 = vpack.c.b16 %v672, %v671
        %v682 = vsel %vm383, %v673, 0
        %v685 = vsel %vm383, %v674, 0
        %v688 = vsel %vm383, %v675, 0
        %v691 = vsel %vm383, %v676, 0
        %v694 = vsel %vm383, %v677, 0
        %v697 = vsel %vm383, %v678, 0
        %v700 = vsel %vm383, %v679, 0
        %v703 = vsel %vm383, %v680, 0
        %v706 = vsel %vm383, %v505, 0
        %v709 = vsel %vm383, %v506, 0
        %v712 = vsel %vm383, %v507, 0
        %v715 = vsel %vm383, %v508, 0
        %v718 = vsel %vm383, %v509, 0
        %v721 = vsel %vm383, %v510, 0
        %v724 = vsel %vm383, %v511, 0
        %v727 = vsel %vm383, %v512, 0
        %729 = vmatprep.subr.bf16.mxu0 0
        %730 = vmatpush1.bf16.xpose.msra.mxu0 %v727
        %731 = vmatprep.subr.bf16.mxu0 0
        %732 = vmatpush1.bf16.xpose.msra.mxu0 %v724
        %733 = vmatprep.subr.bf16.mxu0 0
        %734 = vmatpush1.bf16.xpose.msra.mxu0 %v721
        %735 = vmatprep.subr.bf16.mxu0 0
        %736 = vmatpush1.bf16.xpose.msra.mxu0 %v718
        %737 = vmatprep.subr.bf16.mxu0 0
        %738 = vmatpush1.bf16.xpose.msra.mxu0 %v715
        %739 = vmatprep.subr.bf16.mxu0 0
        %740 = vmatpush1.bf16.xpose.msra.mxu0 %v712
        %741 = vmatprep.subr.bf16.mxu0 0
        %742 = vmatpush1.bf16.xpose.msra.mxu0 %v709
        %743 = vmatprep.subr.bf16.mxu0 0
        %744 = vmatpush1.bf16.xpose.msra.mxu0 %v706
        %745 = vmatprep.subr.bf16.mxu0 0
        %746 = vmatpush2.bf16.xpose.msra.mxu0 0
        %747 = vmatprep.subr.bf16.mxu0 0
        %748 = vmatpush2.bf16.xpose.msra.mxu0 0
        %749 = vmatprep.subr.bf16.mxu0 0
        %750 = vmatpush2.bf16.xpose.msra.mxu0 0
        %751 = vmatprep.subr.bf16.mxu0 0
        %752 = vmatpush2.bf16.xpose.msra.mxu0 0
        %753 = vmatprep.subr.bf16.mxu0 0
        %754 = vmatpush2.bf16.xpose.msra.mxu0 0
        %755 = vmatprep.subr.bf16.mxu0 0
        %756 = vmatpush2.bf16.xpose.msra.mxu0 0
        %757 = vmatprep.subr.bf16.mxu0 0
        %758 = vmatpush2.bf16.xpose.msra.mxu0 0
        %759 = vmatprep.subr.bf16.mxu0 0
        %760 = vmatpush2.bf16.xpose.msra.mxu0 0
        %761 = vmatprep.mubr.bf16.mxu0 0
        %762 = vmatmul.mubr.bf16.gmra.mxu0 %v682
        %v763 = vpop.f32.mrf.mxu0
        %v764 = vadd.f32 %v564, %v763
        %v765 = vpop.f32.mrf.mxu0
        %v766 = vpop.f32.mrf.mxu0
        %v767 = vadd.f32 %v569, %v766
        %v768 = vpop.f32.mrf.mxu0
        %769 = vmatprep.mubr.bf16.mxu0 0
        %770 = vmatmul.mubr.bf16.gmra.mxu0 %v685
        %v771 = vpop.f32.mrf.mxu0
        %v772 = vadd.f32 %v574, %v771
        %v773 = vpop.f32.mrf.mxu0
        %v774 = vpop.f32.mrf.mxu0
        %v775 = vadd.f32 %v579, %v774
        %v776 = vpop.f32.mrf.mxu0
        %777 = vmatprep.mubr.bf16.mxu0 0
        %778 = vmatmul.mubr.bf16.gmra.mxu0 %v688
        %v779 = vpop.f32.mrf.mxu0
        %v780 = vadd.f32 %v584, %v779
        %v781 = vpop.f32.mrf.mxu0
        %v782 = vpop.f32.mrf.mxu0
        %v783 = vadd.f32 %v589, %v782
        %v784 = vpop.f32.mrf.mxu0
        %785 = vmatprep.mubr.bf16.mxu0 0
        %786 = vmatmul.mubr.bf16.gmra.mxu0 %v691
        %v787 = vpop.f32.mrf.mxu0
        %v788 = vadd.f32 %v594, %v787
        %v789 = vpop.f32.mrf.mxu0
        %v790 = vpop.f32.mrf.mxu0
        %v791 = vadd.f32 %v599, %v790
        %v792 = vpop.f32.mrf.mxu0
        %793 = vmatprep.mubr.bf16.mxu0 0
        %794 = vmatmul.mubr.bf16.gmra.mxu0 %v694
        %v795 = vpop.f32.mrf.mxu0
        %v796 = vadd.f32 %v604, %v795
        %v797 = vpop.f32.mrf.mxu0
        %v798 = vpop.f32.mrf.mxu0
        %v799 = vadd.f32 %v609, %v798
        %v800 = vpop.f32.mrf.mxu0
        %801 = vmatprep.mubr.bf16.mxu0 0
        %802 = vmatmul.mubr.bf16.gmra.mxu0 %v697
        %v803 = vpop.f32.mrf.mxu0
        %v804 = vadd.f32 %v614, %v803
        %v805 = vpop.f32.mrf.mxu0
        %v806 = vpop.f32.mrf.mxu0
        %v807 = vadd.f32 %v619, %v806
        %v808 = vpop.f32.mrf.mxu0
        %809 = vmatprep.mubr.bf16.mxu0 0
        %810 = vmatmul.mubr.bf16.gmra.mxu0 %v700
        %v811 = vpop.f32.mrf.mxu0
        %v812 = vadd.f32 %v624, %v811
        %v813 = vpop.f32.mrf.mxu0
        %v814 = vpop.f32.mrf.mxu0
        %v815 = vadd.f32 %v629, %v814
        %v816 = vpop.f32.mrf.mxu0
        %817 = vmatprep.mubr.bf16.mxu0 0
        %818 = vmatmul.mubr.bf16.gmra.mxu0 %v703
        %v819 = vpop.f32.mrf.mxu0
        %v820 = vadd.f32 %v634, %v819
        %v821 = vpop.f32.mrf.mxu0
        %v822 = vpop.f32.mrf.mxu0
        %v823 = vadd.f32 %v639, %v822
        %v824 = vpop.f32.mrf.mxu0
        %825 = vdwg.mxu0
        %v826 = vmax.f32 %v764, %v780
        %v827 = vmax.f32 %v767, %v783
        %v828 = vmax.f32 %v772, %v788
        %v829 = vmax.f32 %v775, %v791
        %v830 = vmax.f32 %v826, %v796
        %v831 = vmax.f32 %v827, %v799
        %v832 = vmax.f32 %v828, %v804
        %v833 = vmax.f32 %v829, %v807
        %v834 = vmax.f32 %v830, %v812
        %v835 = vmax.f32 %v831, %v815
        %v836 = vmax.f32 %v832, %v820
        %v837 = vmax.f32 %v833, %v823
        %v838 = vmax.f32 %v834, %v835
        %v839 = vmax.f32 %v836, %v837
        %v840 = vmax.f32 %v838, %v839
        %v841 = vrot.slane %v840, 4
        %v842 = vmax.f32 %v840, %v841
        %v843 = vrot.slane %v842, 2
        %v844 = vmax.f32 %v842, %v843
        %v845 = vrot.slane %v844, 1
        %v846 = vmax.f32 %v844, %v845
        %v847 = vsub.f32 %v764, %v846
        %v848 = vsub.f32 %v767, %v846
        %v849 = vsub.f32 %v772, %v846
        %v850 = vsub.f32 %v775, %v846
        %v851 = vsub.f32 %v780, %v846
        %v852 = vsub.f32 %v783, %v846
        %v853 = vsub.f32 %v788, %v846
        %v854 = vsub.f32 %v791, %v846
        %v855 = vsub.f32 %v796, %v846
        %v856 = vsub.f32 %v799, %v846
        %v857 = vsub.f32 %v804, %v846
        %v858 = vsub.f32 %v807, %v846
        %v859 = vsub.f32 %v812, %v846
        %v860 = vsub.f32 %v815, %v846
        %v861 = vsub.f32 %v820, %v846
        %v862 = vsub.f32 %v823, %v846
        %v863 = vmul.f32 %v847, 1.442695
        %v864 = vpow.pop %v863
        %v865 = vmul.f32 %v848, 1.442695
        %v866 = vpow.pop %v865
        %v867 = vmul.f32 %v849, 1.442695
        %v868 = vpow.pop %v867
        %v869 = vmul.f32 %v850, 1.442695
        %v870 = vpow.pop %v869
        %v871 = vmul.f32 %v851, 1.442695
        %v872 = vpow.pop %v871
        %v873 = vmul.f32 %v852, 1.442695
        %v874 = vpow.pop %v873
        %v875 = vmul.f32 %v853, 1.442695
        %v876 = vpow.pop %v875
        %v877 = vmul.f32 %v854, 1.442695
        %v878 = vpow.pop %v877
        %v879 = vmul.f32 %v855, 1.442695
        %v880 = vpow.pop %v879
        %v881 = vmul.f32 %v856, 1.442695
        %v882 = vpow.pop %v881
        %v883 = vmul.f32 %v857, 1.442695
        %v884 = vpow.pop %v883
        %v885 = vmul.f32 %v858, 1.442695
        %v886 = vpow.pop %v885
        %v887 = vmul.f32 %v859, 1.442695
        %v888 = vpow.pop %v887
        %v889 = vmul.f32 %v860, 1.442695
        %v890 = vpow.pop %v889
        %v891 = vmul.f32 %v861, 1.442695
        %v892 = vpow.pop %v891
        %v893 = vmul.f32 %v862, 1.442695
        %v894 = vpow.pop %v893
        %v895 = vadd.f32 %v864, %v866
        %v896 = vadd.f32 %v895, %v868
        %v897 = vadd.f32 %v896, %v870
        %v898 = vadd.f32 %v897, %v872
        %v899 = vadd.f32 %v898, %v874
        %v900 = vadd.f32 %v899, %v876
        %v901 = vadd.f32 %v900, %v878
        %v902 = vadd.f32 %v901, %v880
        %v903 = vadd.f32 %v902, %v882
        %v904 = vadd.f32 %v903, %v884
        %v905 = vadd.f32 %v904, %v886
        %v906 = vadd.f32 %v905, %v888
        %v907 = vadd.f32 %v906, %v890
        %v908 = vadd.f32 %v907, %v892
        %v909 = vadd.f32 %v908, %v894
        %v910 = vrot.slane %v909, 4
        %v911 = vadd.f32 %v909, %v910
        %v912 = vrot.slane %v911, 2
        %v913 = vadd.f32 %v911, %v912
        %v914 = vrot.slane %v913, 1
        %v915 = vadd.f32 %v913, %v914
        %v916 = vrcp.pop %v915
        %v917 = vmul.f32 %v864, %v916
        %v918 = vmul.f32 %v866, %v916
        %v919 = vmul.f32 %v868, %v916
        %v920 = vmul.f32 %v870, %v916
        %v921 = vmul.f32 %v872, %v916
        %v922 = vmul.f32 %v874, %v916
        %v923 = vmul.f32 %v876, %v916
        %v924 = vmul.f32 %v878, %v916
        %v925 = vmul.f32 %v880, %v916
        %v926 = vmul.f32 %v882, %v916
        %v927 = vmul.f32 %v884, %v916
        %v928 = vmul.f32 %v886, %v916
        %v929 = vmul.f32 %v888, %v916
        %v930 = vmul.f32 %v890, %v916
        %v931 = vmul.f32 %v892, %v916
        %v932 = vmul.f32 %v894, %v916
        %v933 = vpack.c.bf16 %v918, %v917
        %v934 = vpack.c.bf16 %v920, %v919
        %v935 = vpack.c.bf16 %v922, %v921
        %v936 = vpack.c.bf16 %v924, %v923
        %v937 = vpack.c.bf16 %v926, %v925
        %v938 = vpack.c.bf16 %v928, %v927
        %v939 = vpack.c.bf16 %v930, %v929
        %v940 = vpack.c.bf16 %v932, %v931
        %v941 = vld [vmem:[%s280] sm:$0xf]
        %v942 = vld [vmem:[%s280 + $0x4] sm:$0xf]
        %v945 = vunpack.c.l.b16 %v941
        %v946 = vunpack.c.l.b16 %v942
        %v947 = vpack.c.b16 %v946, %v945
        %949 = vmatprep.subr.bf16.mxu0 0
        %950 = vmatpush1.bf16.msra.mxu0 %v940
        %951 = vmatprep.subr.bf16.mxu0 0
        %952 = vmatpush1.bf16.msra.mxu0 %v939
        %953 = vmatprep.subr.bf16.mxu0 0
        %954 = vmatpush1.bf16.msra.mxu0 %v938
        %955 = vmatprep.subr.bf16.mxu0 0
        %956 = vmatpush1.bf16.msra.mxu0 %v937
        %957 = vmatprep.subr.bf16.mxu0 0
        %958 = vmatpush1.bf16.msra.mxu0 %v936
        %959 = vmatprep.subr.bf16.mxu0 0
        %960 = vmatpush1.bf16.msra.mxu0 %v935
        %961 = vmatprep.subr.bf16.mxu0 0
        %962 = vmatpush1.bf16.msra.mxu0 %v934
        %963 = vmatprep.subr.bf16.mxu0 0
        %964 = vmatpush1.bf16.msra.mxu0 %v933
        %965 = vmatprep.subr.bf16.mxu0 0
        %966 = vmatpush2.bf16.msra.mxu0 0
        %967 = vmatprep.subr.bf16.mxu0 0
        %968 = vmatpush2.bf16.msra.mxu0 0
        %969 = vmatprep.subr.bf16.mxu0 0
        %970 = vmatpush2.bf16.msra.mxu0 0
        %971 = vmatprep.subr.bf16.mxu0 0
        %972 = vmatpush2.bf16.msra.mxu0 0
        %973 = vmatprep.subr.bf16.mxu0 0
        %974 = vmatpush2.bf16.msra.mxu0 0
        %975 = vmatprep.subr.bf16.mxu0 0
        %976 = vmatpush2.bf16.msra.mxu0 0
        %977 = vmatprep.subr.bf16.mxu0 0
        %978 = vmatpush2.bf16.msra.mxu0 0
        %979 = vmatprep.subr.bf16.mxu0 0
        %980 = vmatpush2.bf16.msra.mxu0 0
        %981 = vmatprep.mubr.bf16.mxu0 0
        %982 = vmatmul.mubr.bf16.gmra.mxu0 %v947
        %v983 = vpop.f32.mrf.mxu0
        %v984 = vadd.f32 0.0, %v983
        %v985 = vpop.f32.mrf.mxu0
        %v986 = vpop.f32.mrf.mxu0
        %v987 = vadd.f32 0.0, %v986
        %v988 = vpop.f32.mrf.mxu0
        %989 = vdwg.mxu0
        %s990 = sld [smem:[#allocation2]]
        %v991 = vld [vmem:[%s288] sm:$0xff]
        %v992 = vld [vmem:[%s288 + $0x8] sm:$0xff]
        %v993 = vstv %s990
        %v994 = vmul.f32 %v993, %v984
        %v995 = vmul.f32 %v993, %v987
        %v996 = vadd.f32 %v994, %v991
        %v997 = vadd.f32 %v995, %v992
        %998 = vst [vmem:[%s270] sm:$0xff] %v996
        %999 = vst [vmem:[%s270 + $0x8] sm:$0xff] %v997
        %s1000 = sand.u32 %s164, 1
        %s1001 = scalar_lea.sflag [#allocation4], %s1000
        %s1002 = sand.u32 %s164, 1
        %s1003 = smul.addr %s1002, 16
        %s1004 = scalar_lea.vmem [#allocation3], %s1003
        // Predicated region
        $region41: #{tpu_custom_call.1} parent=39 // pred_check
          %p1005 = pneg %p174
        $region42: #{tpu_custom_call.1} parent=39 // pred_check_branch
          %1007 = sbr.rel (%p1005) target = $region44
        $region43: #{tpu_custom_call.1} parent=39 // pred_region
          %s1009 = ssub.s32 256, 256
          %1010 = vsyncadd %s1001, %s1009
          %s1011 = smul.addr %s24, 2
          %s1012 = sadd.s32 %s25, %s1011
          %s1013 = smul.addr %s1012, 128
          %s1014 = scalar_lea.hbm %s5, %s1013
          %s1015 = sshll.u32 %s1004, 4
          %s1016 = int_to_ptr.vmem [resolvable:$true] %s1015
          %1021 = dma.vmem_to_hbm [thread:$0]  %s1016, 256, %s1014, %s1001, 128, 128, 8
        $region44: #{tpu_custom_call.1} parent=39 // pred_fallthru
          _
      $region40: #{tpu_custom_call.1} parent=5 // pred_fallthru
        _
      %p1022 = scmp.le.s32.totalorder 2, %s15
      // Predicated region
      $region45: #{tpu_custom_call.1} parent=5 // pred_check
        %p1023 = pneg %p1022
      $region46: #{tpu_custom_call.1} parent=5 // pred_check_branch
        %1025 = sbr.rel (%p1023) target = $region48
      $region47: #{tpu_custom_call.1} parent=5 // pred_region
        %s1026 = ssub.s32 %s15, 2
        // Predicated region
        $region49: #{tpu_custom_call.1} parent=47 // pred_check
          %p1027 = pneg %p180
        $region50: #{tpu_custom_call.1} parent=47 // pred_check_branch
          %1029 = sbr.rel (%p1027) target = $region52
        $region51: #{tpu_custom_call.1} parent=47 // pred_region
          %s1030 = sand.u32 %s165, 1
          %s1031 = scalar_lea.sflag [#allocation4], %s1030
          %s1032 = sand.u32 %s165, 1
          %s1033 = smul.addr %s1032, 16
          %s1034 = scalar_lea.vmem [#allocation3], %s1033
          %1035 = dma.done %s1031, 256
        $region52: #{tpu_custom_call.1} parent=47 // pred_fallthru
          _
      $region48: #{tpu_custom_call.1} parent=5 // pred_fallthru
        _
    $region6: #{tpu_custom_call.1} parent=1 // loop_footer
      %s19 = sadd.s32 1, %s15
    $region7: #{tpu_custom_call.1} parent=1 // loop_footer_branch
      %14 = sbr.rel target = $region3
    $region8: #{tpu_custom_call.1} parent=1 // loop_exit
      _
    %1036 = vsyncpa [#allocation4], 1
    %s1037 = scalar_lea.sflag [#allocation4], 1
    %1038 = vsyncpa %s1037, 1

</llo_original>
